<compile_context>
chip_gen: v6e
topology: v6e:2x2x1
jax: 0.10.0
libtpu: 0.0.40
codegen_flags: <defaults>
</compile_context>

<pallas_src>
import functools

import jax
import jax.numpy as jnp
from jax.experimental import pallas as pl
from jax.experimental.pallas import tpu as pltpu


def _round_up(x, m):
    return ((x + m - 1) // m) * m


def _actor_kernel(x_ref, w1_ref, b1_ref, w2_ref, b2_ref, out_ref, *,
                  apply_softmax):
    # First linear: (TB, I)f32 -> bf16 cast on the VPU, MXU matmul with f32 acc.
    x = x_ref[...].astype(jnp.bfloat16)
    h = jnp.dot(x, w1_ref[...], preferred_element_type=jnp.float32)
    h = jnp.maximum(h + b1_ref[...], 0.0)

    # Second linear: (TB, H)bf16 @ (H, O)bf16 -> (TB, O) f32 logits (unpadded).
    logits = jnp.dot(h.astype(jnp.bfloat16), w2_ref[...],
                     preferred_element_type=jnp.float32)
    logits = logits + b2_ref[...]

    if apply_softmax:
        # torch.softmax(x, dim=1); no lane mask needed since O is unpadded.
        m = jnp.max(logits, axis=1, keepdims=True)
        e = jnp.exp(logits - m)
        denom = jnp.sum(e, axis=1, keepdims=True)
        logits = e * pl.reciprocal(denom, approx=False)

    out_ref[...] = logits.astype(out_ref.dtype)


def prepare_params(w1, b1, w2, b2):
    """One-time parameter prep (outside the hot path).

    PyTorch layout (w: (out, in), b: (out,)) -> MXU-friendly bf16 (in, out)
    weights and (1, out) f32 biases.  No output padding (unpadded writeback).
    """
    w1t = jnp.asarray(w1.T, jnp.bfloat16)                     # (I, H)
    b1r = jnp.asarray(b1, jnp.float32).reshape(1, -1)          # (1, H)
    w2t = jnp.asarray(w2.T, jnp.bfloat16)                     # (H, O)
    b2r = jnp.asarray(b2, jnp.float32).reshape(1, -1)          # (1, O)
    return w1t, b1r, w2t, b2r


def _cost_estimate(batch, in_f, hidden, out_f, apply_softmax):
    flops = 2 * batch * (in_f * hidden + hidden * out_f)
    transcendentals = batch * out_f if apply_softmax else 0
    bytes_accessed = (batch * in_f * 4          # x read (f32)
                      + in_f * hidden * 2       # w1 (bf16)
                      + hidden * 4              # b1
                      + hidden * out_f * 2      # w2 (bf16)
                      + out_f * 4               # b2
                      + batch * out_f * 4)      # output write (f32, unpadded)
    return pl.CostEstimate(flops=flops, transcendentals=transcendentals,
                           bytes_accessed=bytes_accessed)


@functools.partial(jax.jit, static_argnames=("apply_softmax", "tile_b"))
def actor_net_forward(x, w1t, b1r, w2t, b2r, *, apply_softmax, tile_b=2048):
    """x: (B, I) f32. Params from prepare_params(). Returns (B, O) f32."""
    B, I = x.shape
    H = w1t.shape[1]
    O = w2t.shape[1]
    kernel = functools.partial(_actor_kernel, apply_softmax=apply_softmax)

    if B <= tile_b:
        # Grid-less: everything VMEM-resident, no pipelining machinery.
        return pl.pallas_call(
            kernel,
            out_shape=jax.ShapeDtypeStruct((B, O), jnp.float32),
            in_specs=[pl.BlockSpec(memory_space=pltpu.MemorySpace.VMEM)] * 5,
            out_specs=pl.BlockSpec(memory_space=pltpu.MemorySpace.VMEM),
            cost_estimate=_cost_estimate(B, I, H, O, apply_softmax),
        )(x, w1t, b1r, w2t, b2r)

    # Batched: real batch grid axis ("parallel" -> both TCs on v7x).
    # No explicit padding: Pallas handles the ragged final block.
    TB = tile_b
    if B < 2 * TB:
        # Ensure >=2 grid steps so v7x's second TensorCore gets balanced work.
        TB = max(8, _round_up(pl.cdiv(B, 2), 8))
    grid = (pl.cdiv(B, TB),)

    return pl.pallas_call(
        kernel,
        out_shape=jax.ShapeDtypeStruct((B, O), jnp.float32),
        grid=grid,
        in_specs=[
            pl.BlockSpec((TB, I), lambda i: (i, 0)),
            pl.BlockSpec((I, H), lambda i: (0, 0)),   # weights stay resident
            pl.BlockSpec((1, H), lambda i: (0, 0)),
            pl.BlockSpec((H, O), lambda i: (0, 0)),
            pl.BlockSpec((1, O), lambda i: (0, 0)),
        ],
        out_specs=pl.BlockSpec((TB, O), lambda i: (i, 0)),
        compiler_params=pltpu.CompilerParams(
            dimension_semantics=("parallel",)),
        cost_estimate=_cost_estimate(B, I, H, O, apply_softmax),
    )(x, w1t, b1r, w2t, b2r)


def _init_linear(key, out_features, in_features):
    """Deterministic init mimicking torch.nn.Linear default (uniform +-1/sqrt(fan_in))."""
    kw, kb = jax.random.split(key)
    bound = 1.0 / jnp.sqrt(jnp.float32(in_features))
    w = jax.random.uniform(kw, (out_features, in_features), jnp.float32, -bound, bound)
    b = jax.random.uniform(kb, (out_features,), jnp.float32, -bound, bound)
    return w, b


def _reference(x, w1, b1, w2, b2, apply_softmax):
    h = jnp.maximum(x @ w1.T + b1, 0.0)
    logits = h @ w2.T + b2
    if apply_softmax:
        logits = jax.nn.softmax(logits, axis=1)
    return logits


if __name__ == "__main__":
    # Small shapes consistent with the module: input=16, hidden=32, out=8.
    INPUT, HIDDEN, OUTPUT = 16, 32, 8

    key = jax.random.PRNGKey(0)
    kx, k1, k2, kx2 = jax.random.split(key, 4)
    w1, b1 = _init_linear(k1, HIDDEN, INPUT)
    w2, b2 = _init_linear(k2, OUTPUT, HIDDEN)
    params = prepare_params(w1, b1, w2, b2)   # one-time layout prep

    # TODO(synk): cfg.agent_type is an external global in the original module;
    # the 'dac' softmax branch is exposed here as an explicit flag.

    # --- small-batch path (grid-less, VMEM-resident), softmax on ('dac') ---
    B = 8
    x = jax.random.normal(kx, (B, INPUT), jnp.float32)
    out = actor_net_forward(x, *params, apply_softmax=True)
    out = jax.block_until_ready(out)
    ref = _reference(x, w1, b1, w2, b2, True)
    assert out.shape == (B, OUTPUT)
    # bf16 MXU operands -> relaxed tolerance vs f32 reference.
    assert jnp.allclose(out, ref, atol=3e-2, rtol=3e-2), "softmax path mismatch"

    # --- batched path (batch grid axis, ragged last block), softmax off ----
    BB = 300   # deliberately not a multiple of the tile to exercise raggedness
    xb = jax.random.normal(kx2, (BB, INPUT), jnp.float32)
    outb = actor_net_forward(xb, *params, apply_softmax=False, tile_b=128)
    outb = jax.block_until_ready(outb)
    refb = _reference(xb, w1, b1, w2, b2, False)
    assert outb.shape == (BB, OUTPUT)
    assert jnp.allclose(outb, refb, atol=3e-2, rtol=3e-2), "batched path mismatch"

    print("KERNEL_OK")
</pallas_src>

<mosaic_0001>
module attributes {stable_mosaic.version = 11 : i64} {
  func.func @_actor_kernel(%arg0: memref<8x16xf32, #tpu.memory_space<vmem>>, %arg1: memref<16x32xbf16, #tpu.memory_space<vmem>>, %arg2: memref<1x32xf32, #tpu.memory_space<vmem>>, %arg3: memref<32x8xbf16, #tpu.memory_space<vmem>>, %arg4: memref<1x8xf32, #tpu.memory_space<vmem>>, %arg5: memref<8x8xf32, #tpu.memory_space<vmem>>) attributes {dimension_semantics = [], scalar_prefetch = 0 : i64, scratch_operands = 0 : i64, tpu.core_type = #tpu.core_type<tc>} {
    %c0 = arith.constant 0 : index
    %c0_0 = arith.constant 0 : index
    %0 = vector.load %arg0[%c0, %c0_0] : memref<8x16xf32, #tpu.memory_space<vmem>>, vector<8x16xf32>
    %1 = arith.truncf %0 : vector<8x16xf32> to vector<8x16xbf16>
    %c0_1 = arith.constant 0 : index
    %c0_2 = arith.constant 0 : index
    %2 = vector.load %arg1[%c0_1, %c0_2] : memref<16x32xbf16, #tpu.memory_space<vmem>>, vector<16x32xbf16>
    %cst = arith.constant dense<0.000000e+00> : vector<8x32xf32>
    %3 = tpu.matmul %1, %2, %cst {dimension_numbers = #tpu.dot_dimension_numbers<[1], [0], [0], [1], [0, 0, 1, 1], [], []>} : vector<8x16xbf16>, vector<16x32xbf16>, vector<8x32xf32> -> vector<8x32xf32>
    %c0_3 = arith.constant 0 : index
    %c0_4 = arith.constant 0 : index
    %4 = vector.load %arg2[%c0_3, %c0_4] : memref<1x32xf32, #tpu.memory_space<vmem>>, vector<1x32xf32>
    %5 = vector.broadcast %4 : vector<1x32xf32> to vector<8x32xf32>
    %6 = arith.addf %3, %5 : vector<8x32xf32>
    %cst_5 = arith.constant 0.000000e+00 : f32
    %7 = vector.broadcast %cst_5 : f32 to vector<8x32xf32>
    %8 = arith.maximumf %6, %7 : vector<8x32xf32>
    %9 = arith.truncf %8 : vector<8x32xf32> to vector<8x32xbf16>
    %c0_6 = arith.constant 0 : index
    %c0_7 = arith.constant 0 : index
    %10 = vector.load %arg3[%c0_6, %c0_7] : memref<32x8xbf16, #tpu.memory_space<vmem>>, vector<32x8xbf16>
    %cst_8 = arith.constant dense<0.000000e+00> : vector<8x8xf32>
    %11 = tpu.matmul %9, %10, %cst_8 {dimension_numbers = #tpu.dot_dimension_numbers<[1], [0], [0], [1], [0, 0, 1, 1], [], []>} : vector<8x32xbf16>, vector<32x8xbf16>, vector<8x8xf32> -> vector<8x8xf32>
    %c0_9 = arith.constant 0 : index
    %c0_10 = arith.constant 0 : index
    %12 = vector.load %arg4[%c0_9, %c0_10] : memref<1x8xf32, #tpu.memory_space<vmem>>, vector<1x8xf32>
    %13 = vector.broadcast %12 : vector<1x8xf32> to vector<8x8xf32>
    %14 = arith.addf %11, %13 : vector<8x8xf32>
    %cst_11 = arith.constant dense<0xFF800000> : vector<8xf32>
    %15 = vector.multi_reduction <maximumf>, %14, %cst_11 [1] : vector<8x8xf32> to vector<8xf32>
    %16 = vector.shape_cast %15 : vector<8xf32> to vector<8x1xf32>
    %17 = vector.broadcast %16 : vector<8x1xf32> to vector<8x8xf32>
    %18 = arith.subf %14, %17 : vector<8x8xf32>
    %19 = math.exp %18 : vector<8x8xf32>
    %cst_12 = arith.constant dense<0.000000e+00> : vector<8xf32>
    %20 = vector.multi_reduction <add>, %19, %cst_12 [1] : vector<8x8xf32> to vector<8xf32>
    %21 = vector.shape_cast %20 : vector<8xf32> to vector<8x1xf32>
    %22 = tpu.reciprocal %21 : vector<8x1xf32> -> vector<8x1xf32>
    %23 = vector.broadcast %22 : vector<8x1xf32> to vector<8x8xf32>
    %24 = arith.mulf %19, %23 : vector<8x8xf32>
    %c0_13 = arith.constant 0 : index
    %c0_14 = arith.constant 0 : index
    %25 = vector.load %arg5[%c0_13, %c0_14] : memref<8x8xf32, #tpu.memory_space<vmem>>, vector<8x8xf32>
    tpu.vector_store %arg5[%c0_13, %c0_14], %24 {strides = array<i32>} : memref<8x8xf32, #tpu.memory_space<vmem>>, vector<8x8xf32>,
    return
  }
}

</mosaic_0001>

<llo_original>
// kernel: actor_net_forward.1
$region0: #{actor_net_forward.1}
  #allocation0 [shape = 'u32[]', space=smem, size = 0x4, offset = 0x4, fixed_abs, tag = 'smem constant byte address 0x4 - core index']
  #allocation1 [shape = 'u32[144,128]{1,0:T(1,128)}', space=vmem, size = 0x12000, scoped, tag = 'internal scratch']
  %s0 = inlined_call_operand.vmem [shape: f32[8,16], index: 0, kind: input, shape index: {}]
  %s1 = inlined_call_operand.vmem [shape: bf16[16,32], index: 1, kind: input, shape index: {}]
  %s2 = inlined_call_operand.vmem [shape: f32[1,32], index: 2, kind: input, shape index: {}]
  %s3 = inlined_call_operand.vmem [shape: bf16[32,8], index: 3, kind: input, shape index: {}]
  %s4 = inlined_call_operand.vmem [shape: f32[1,8], index: 4, kind: input, shape index: {}]
  %s5 = inlined_call_operand.hbm [shape: f32[8,8], index: 5, kind: output, shape index: {}]
  %s6 = sld [smem:[#allocation0]]
  $region30: #{actor_net_forward.1} parent=0
    _
  %s8 = ssub.s32 1, %s6
  %s9 = scalar_select 0, %s8, %s6
  $region1: #{actor_net_forward.1} parent=0
    #allocation2 [shape = 'u8[4096]{0}', space=vmem, size = 0x1000, scoped, tag = 'output window, operand 0, single buffered']
    #allocation3 [shape = 's32[1]{0}', space=sflag, size = 0x4, scoped, tag = 'scoped memory for actor_net_forward.1']
    %10 = vsyncpa [#allocation3], 0
    // Predicated region
    $region2: #{actor_net_forward.1} parent=1 // pred_check
      _
    $region3: #{actor_net_forward.1} parent=1 // pred_check_branch
      %12 = sbr.rel (0) target = $region5
    $region4: #{actor_net_forward.1} parent=1 // pred_region
      _
    $region5: #{actor_net_forward.1} parent=1 // pred_fallthru
      _
    // Predicated region
    $region6: #{actor_net_forward.1} parent=1 // pred_check
      _
    $region7: #{actor_net_forward.1} parent=1 // pred_check_branch
      %14 = sbr.rel (0) target = $region9
    $region8: #{actor_net_forward.1} parent=1 // pred_region
      _
    $region9: #{actor_net_forward.1} parent=1 // pred_fallthru
      _
    // Predicated region
    $region10: #{actor_net_forward.1} parent=1 // pred_check
      _
    $region11: #{actor_net_forward.1} parent=1 // pred_check_branch
      %16 = sbr.rel (0) target = $region13
    $region12: #{actor_net_forward.1} parent=1 // pred_region
      _
    $region13: #{actor_net_forward.1} parent=1 // pred_fallthru
      _
    // Predicated region
    $region14: #{actor_net_forward.1} parent=1 // pred_check
      _
    $region15: #{actor_net_forward.1} parent=1 // pred_check_branch
      %18 = sbr.rel (0) target = $region17
    $region16: #{actor_net_forward.1} parent=1 // pred_region
      _
    $region17: #{actor_net_forward.1} parent=1 // pred_fallthru
      _
    // Predicated region
    $region18: #{actor_net_forward.1} parent=1 // pred_check
      _
    $region19: #{actor_net_forward.1} parent=1 // pred_check_branch
      %20 = sbr.rel (0) target = $region21
    $region20: #{actor_net_forward.1} parent=1 // pred_region
      _
    $region21: #{actor_net_forward.1} parent=1 // pred_fallthru
      _
    %v22 = vld [vmem:[%s0] sm:$0xff]
    %v23 = vpack.c.bf16 %v22, %v22
    %v24 = vld [vmem:[%s1] sm:$0xf]
    %v25 = vld [vmem:[%s1 + $0x4] sm:$0xf]
    %v26 = vld [vmem:[%s2] sm:$0x1]
    %v28 = vlaneseq
    %v29 = vshrl.u32 %v28, 7
    %v30 = vsub.s32 0, %v29
    %v31 = vrot.slane %v26, %v30
    %v35 = vunpack.c.l.b16 %v24
    %v36 = vunpack.c.l.b16 %v25
    %v37 = vpack.c.b16 %v36, %v35
    %vm39 = vcmask 130048
    %v41 = vsel %vm39, %v23, 0
    %43 = vmatprep.subr.bf16.mxu0 0
    %44 = vmatpush1.bf16.msra.mxu0 0
    %45 = vmatprep.subr.bf16.mxu0 0
    %46 = vmatpush1.bf16.msra.mxu0 0
    %47 = vmatprep.subr.bf16.mxu0 0
    %48 = vmatpush1.bf16.msra.mxu0 0
    %49 = vmatprep.subr.bf16.mxu0 0
    %50 = vmatpush1.bf16.msra.mxu0 0
    %51 = vmatprep.subr.bf16.mxu0 0
    %52 = vmatpush1.bf16.msra.mxu0 0
    %53 = vmatprep.subr.bf16.mxu0 0
    %54 = vmatpush1.bf16.msra.mxu0 0
    %55 = vmatprep.subr.bf16.mxu0 0
    %56 = vmatpush1.bf16.msra.mxu0 0
    %57 = vmatprep.subr.bf16.mxu0 0
    %58 = vmatpush1.bf16.msra.mxu0 %v37
    %59 = vmatprep.subr.bf16.mxu0 0
    %60 = vmatpush2.bf16.msra.mxu0 0
    %61 = vmatprep.subr.bf16.mxu0 0
    %62 = vmatpush2.bf16.msra.mxu0 0
    %63 = vmatprep.subr.bf16.mxu0 0
    %64 = vmatpush2.bf16.msra.mxu0 0
    %65 = vmatprep.subr.bf16.mxu0 0
    %66 = vmatpush2.bf16.msra.mxu0 0
    %67 = vmatprep.subr.bf16.mxu0 0
    %68 = vmatpush2.bf16.msra.mxu0 0
    %69 = vmatprep.subr.bf16.mxu0 0
    %70 = vmatpush2.bf16.msra.mxu0 0
    %71 = vmatprep.subr.bf16.mxu0 0
    %72 = vmatpush2.bf16.msra.mxu0 0
    %73 = vmatprep.subr.bf16.mxu0 0
    %74 = vmatpush2.bf16.msra.mxu0 0
    %75 = vmatprep.mubr.bf16.mxu0 0
    %76 = vmatmul.mubr.bf16.gmra.mxu0 %v41
    %v77 = vpop.f32.mrf.mxu0
    %v78 = vadd.f32 %v31, %v77
    %v79 = vpop.f32.mrf.mxu0
    %v80 = vpop.f32.mrf.mxu0
    %v81 = vpop.f32.mrf.mxu0
    %82 = vdwg.mxu0
    %v83 = vmax.f32 %v78, 0.0
    %v84 = vpack.c.bf16 %v83, %v83
    %v85 = vld [vmem:[%s3] sm:$0xf]
    %v86 = vld [vmem:[%s3 + $0x4] sm:$0xf]
    %v87 = vld [vmem:[%s3 + $0x8] sm:$0xf]
    %v88 = vld [vmem:[%s3 + $0xc] sm:$0xf]
    %v89 = vld [vmem:[%s4] sm:$0x1]
    %v91 = vlaneseq
    %v92 = vshrl.u32 %v91, 7
    %v93 = vsub.s32 0, %v92
    %v94 = vrot.slane %v89, %v93
    %v100 = vunpack.c.l.b16 %v85
    %v101 = vunpack.c.l.b16 %v86
    %v102 = vunpack.c.l.b16 %v87
    %v103 = vunpack.c.l.b16 %v88
    %v104 = vpack.c.b16 %v101, %v100
    %v105 = vpack.c.b16 %v103, %v102
    %vm108 = vcmask 261120
    %v110 = vsel %vm108, %v84, 0
    %112 = vmatprep.subr.bf16.mxu0 0
    %113 = vmatpush1.bf16.msra.mxu0 0
    %114 = vmatprep.subr.bf16.mxu0 0
    %115 = vmatpush1.bf16.msra.mxu0 0
    %116 = vmatprep.subr.bf16.mxu0 0
    %117 = vmatpush1.bf16.msra.mxu0 0
    %118 = vmatprep.subr.bf16.mxu0 0
    %119 = vmatpush1.bf16.msra.mxu0 0
    %120 = vmatprep.subr.bf16.mxu0 0
    %121 = vmatpush1.bf16.msra.mxu0 0
    %122 = vmatprep.subr.bf16.mxu0 0
    %123 = vmatpush1.bf16.msra.mxu0 0
    %124 = vmatprep.subr.bf16.mxu0 0
    %125 = vmatpush1.bf16.msra.mxu0 %v105
    %126 = vmatprep.subr.bf16.mxu0 0
    %127 = vmatpush1.bf16.msra.mxu0 %v104
    %128 = vmatprep.subr.bf16.mxu0 0
    %129 = vmatpush2.bf16.msra.mxu0 0
    %130 = vmatprep.subr.bf16.mxu0 0
    %131 = vmatpush2.bf16.msra.mxu0 0
    %132 = vmatprep.subr.bf16.mxu0 0
    %133 = vmatpush2.bf16.msra.mxu0 0
    %134 = vmatprep.subr.bf16.mxu0 0
    %135 = vmatpush2.bf16.msra.mxu0 0
    %136 = vmatprep.subr.bf16.mxu0 0
    %137 = vmatpush2.bf16.msra.mxu0 0
    %138 = vmatprep.subr.bf16.mxu0 0
    %139 = vmatpush2.bf16.msra.mxu0 0
    %140 = vmatprep.subr.bf16.mxu0 0
    %141 = vmatpush2.bf16.msra.mxu0 0
    %142 = vmatprep.subr.bf16.mxu0 0
    %143 = vmatpush2.bf16.msra.mxu0 0
    %144 = vmatprep.mubr.bf16.mxu0 0
    %145 = vmatmul.mubr.bf16.gmra.mxu0 %v110
    %v146 = vpop.f32.mrf.mxu0
    %v147 = vadd.f32 %v94, %v146
    %v148 = vpop.f32.mrf.mxu0
    %v149 = vpop.f32.mrf.mxu0
    %v150 = vpop.f32.mrf.mxu0
    %151 = vdwg.mxu0
    %vm152 = vcmask 64512
    %v153 = vsel %vm152, %v147, -inf
    %154 = vmax.xlane.f32.xlu0 %v153
    %v155 = vpop.xlane.xlu0 %154
    %v156 = vsub.f32 %v147, %v155
    %v157 = vmul.f32 %v156, 1.442695
    %v158 = vpow.pop %v157
    %v159 = vsel %vm152, %v158, 0.0
    %160 = vadd.xlane.f32.xlu0 %v159
    %v161 = vpop.xlane.xlu0 %160
    %v162 = vrcp.pop %v161
    %v163 = vmul.f32 %v158, %v162
    %164 = vst.msk [vmem:[#allocation2] sm:$0xff] %vm152, %v163
    // Predicated region
    $region22: #{actor_net_forward.1} parent=1 // pred_check
      _
    $region23: #{actor_net_forward.1} parent=1 // pred_check_branch
      %166 = sbr.rel (0) target = $region25
    $region24: #{actor_net_forward.1} parent=1 // pred_region
      %s168 = ssub.s32 128, 128
      %169 = vsyncadd [#allocation3], %s168
      %s171 = sshll.u32 [#allocation2], 4
      %s172 = int_to_ptr.vmem [resolvable:$true] %s171
      %174 = dma.vmem_to_hbm [thread:$0]  %s172, 128, %s5, [#allocation3]
    $region25: #{actor_net_forward.1} parent=1 // pred_fallthru
      _
    // Predicated region
    $region26: #{actor_net_forward.1} parent=1 // pred_check
      _
    $region27: #{actor_net_forward.1} parent=1 // pred_check_branch
      %176 = sbr.rel (0) target = $region29
    $region28: #{actor_net_forward.1} parent=1 // pred_region
      %177 = dma.done [#allocation3], 128
    $region29: #{actor_net_forward.1} parent=1 // pred_fallthru
      _
    %178 = vsyncpa [#allocation3], 1

</llo_original>
